<compile_context>
chip_gen: v5e
topology: v5e:2x2
jax: 0.10.0
libtpu: 0.0.40
codegen_flags: <defaults>
</compile_context>

<pallas_src>
import functools

import jax
import jax.numpy as jnp
from jax.experimental import pallas as pl
from jax.experimental.pallas import tpu as pltpu


LANE = 128      # TPU lane width (last-dim native tile)
SUBLANE = 8     # TPU sublane width (second-to-last dim native tile)


def _round_up(x, m):
    return (x + m - 1) // m * m


def _cdiv(a, b):
    return -(-a // b)


def _pad_to(x, shape):
    pads = [(0, t - s) for s, t in zip(x.shape, shape)]
    if all(p == (0, 0) for p in pads):
        return x
    return jnp.pad(x, pads)


# ----------------------------- Pallas kernel --------------------------------

def _mapping_network_kernel(z_ref,
                            w0_ref, b0_ref,
                            w1_ref, b1_ref,
                            w2_ref, b2_ref,
                            wo_ref, bo_ref,
                            out_ref):
    """Whole 4-layer MLP for one batch tile. All weights resident in VMEM.

    Matmul inputs are bf16, accumulation and bias-add are f32 (VPU), leaky_relu
    is a single jnp.where select per vreg. Zero-padded hidden columns stay
    exactly zero through every layer, so padding never perturbs the result.
    """
    def leaky_relu(x):
        return jnp.where(x > 0, x, 0.2 * x)

    z = z_ref[...].astype(jnp.bfloat16)           # cast in-kernel (no wrapper pass)

    h = jnp.dot(z, w0_ref[...],
                preferred_element_type=jnp.float32) + b0_ref[...]
    h = leaky_relu(h).astype(jnp.bfloat16)

    h = jnp.dot(h, w1_ref[...],
                preferred_element_type=jnp.float32) + b1_ref[...]
    h = leaky_relu(h).astype(jnp.bfloat16)

    h = jnp.dot(h, w2_ref[...],
                preferred_element_type=jnp.float32) + b2_ref[...]
    h = leaky_relu(h).astype(jnp.bfloat16)

    out = jnp.dot(h, wo_ref[...],
                  preferred_element_type=jnp.float32) + bo_ref[...]
    out_ref[...] = out.astype(out_ref.dtype)       # direct O-wide store (no pad/slice)


# --------------------- one-time parameter preparation ------------------------

def prepare_params(params):
    """Pad hidden dims to 128 and cast weights to bf16 ONCE (cache the result).

    Zero padding is exact: padded hidden columns get zero weight + zero bias, so
    they stay exactly 0 after leaky_relu; padded rows of the next weight then
    multiply zeros. The z feature dim and the output dim are NOT padded.
    """
    z_dim, H = params["w0"].shape
    O = params["wo"].shape[1]
    Hp = _round_up(H, LANE)
    return {
        "w0": _pad_to(params["w0"], (z_dim, Hp)).astype(jnp.bfloat16),
        "b0": _pad_to(params["b0"], (1, Hp)).astype(jnp.float32),
        "w1": _pad_to(params["w1"], (Hp, Hp)).astype(jnp.bfloat16),
        "b1": _pad_to(params["b1"], (1, Hp)).astype(jnp.float32),
        "w2": _pad_to(params["w2"], (Hp, Hp)).astype(jnp.bfloat16),
        "b2": _pad_to(params["b2"], (1, Hp)).astype(jnp.float32),
        "wo": _pad_to(params["wo"], (Hp, O)).astype(jnp.bfloat16),
        "bo": params["bo"].astype(jnp.float32),
    }


# ------------------------------- wrapper -------------------------------------

def mapping_network_forward(z, prepared, *, max_batch_tile=512, min_grid_steps=1,
                            out_dtype=None):
    """Forward pass.

    z:            (B, z_dim) float32 (cast to bf16 inside the kernel).
    prepared:     output of prepare_params() (pad + cast hoisted out of the call).
    max_batch_tile: rows per grid step for large B (512+ recommended everywhere).
    min_grid_steps: set to 2 on v7x for large B so both TensorCores get work.
    out_dtype:    output dtype (default: z.dtype == f32, matching the module;
                  pass jnp.bfloat16 to halve output HBM traffic if acceptable).
    """
    B, z_dim = z.shape
    Hp = prepared["w0"].shape[1]
    O = prepared["wo"].shape[1]
    out_dtype = z.dtype if out_dtype is None else out_dtype

    # Balanced batch tiling. Boundary blocks (B % bt != 0) are handled by
    # Pallas's masked reads/writes -- no explicit padding of z or the output.
    n_steps = max(int(min_grid_steps), _cdiv(B, max_batch_tile))
    if n_steps <= 1:
        bt = B                                     # single full-extent block
        n_steps = 1
    else:
        bt = min(_round_up(_cdiv(B, n_steps), SUBLANE), _round_up(B, SUBLANE))
        n_steps = _cdiv(B, bt)

    def full_spec(arr):
        # Constant block index: weights/biases stay resident across grid steps.
        # For very large H, add pipeline_mode=pl.Buffered(1) here to drop the
        # pointless double-buffering of resident weights.
        return pl.BlockSpec(arr.shape, lambda i: (0, 0))

    flops = 2 * B * (z_dim * Hp + 2 * Hp * Hp + Hp * O)
    bytes_accessed = (
        int(z.size) * z.dtype.itemsize
        + sum(int(v.size) * v.dtype.itemsize for v in prepared.values())
        + B * O * jnp.dtype(out_dtype).itemsize
    )
    cost = pl.CostEstimate(flops=int(flops), transcendentals=0,
                           bytes_accessed=int(bytes_accessed))

    return pl.pallas_call(
        _mapping_network_kernel,
        out_shape=jax.ShapeDtypeStruct((B, O), out_dtype),
        grid_spec=pltpu.PrefetchScalarGridSpec(
            num_scalar_prefetch=0,
            grid=(n_steps,),
            in_specs=[
                pl.BlockSpec((bt, z_dim), lambda i: (i, 0)),   # z batch tile (unpadded K)
                full_spec(prepared["w0"]), full_spec(prepared["b0"]),
                full_spec(prepared["w1"]), full_spec(prepared["b1"]),
                full_spec(prepared["w2"]), full_spec(prepared["b2"]),
                full_spec(prepared["wo"]), full_spec(prepared["bo"]),
            ],
            out_specs=pl.BlockSpec((bt, O), lambda i: (i, 0)),  # O-wide store
        ),
        compiler_params=pltpu.CompilerParams(
            dimension_semantics=("parallel",)),
        cost_estimate=cost,
    )(z, prepared["w0"], prepared["b0"], prepared["w1"], prepared["b1"],
      prepared["w2"], prepared["b2"], prepared["wo"], prepared["bo"])


# --------------------------- parameter construction --------------------------

def _kaiming_leaky_normal(key, fan_in, fan_out, a=0.2):
    # torch.nn.init.kaiming_normal_(w, a=0.2, mode='fan_in', nonlinearity='leaky_relu')
    gain = jnp.sqrt(2.0 / (1.0 + a * a))
    std = gain / jnp.sqrt(float(fan_in))
    # stored transposed: (in, out)
    return std * jax.random.normal(key, (fan_in, fan_out), dtype=jnp.float32)


def _linear_bias(key, fan_in, fan_out):
    # torch default Linear bias init: U(-1/sqrt(fan_in), 1/sqrt(fan_in))
    bound = 1.0 / jnp.sqrt(float(fan_in))
    return jax.random.uniform(key, (1, fan_out), dtype=jnp.float32,
                              minval=-bound, maxval=bound)


def make_params(key, z_dim, map_hidden_dim, map_output_dim):
    # TODO(synk): only the default hidden=2 configuration (no skip concat) is built.
    ks = jax.random.split(key, 8)
    return {
        "w0": _kaiming_leaky_normal(ks[0], z_dim, map_hidden_dim),
        "b0": _linear_bias(ks[1], z_dim, map_hidden_dim),
        "w1": _kaiming_leaky_normal(ks[2], map_hidden_dim, map_hidden_dim),
        "b1": _linear_bias(ks[3], map_hidden_dim, map_hidden_dim),
        "w2": _kaiming_leaky_normal(ks[4], map_hidden_dim, map_hidden_dim),
        "b2": _linear_bias(ks[5], map_hidden_dim, map_hidden_dim),
        # output layer: init, then `weight *= 0.25` as in __init__
        "wo": 0.25 * _kaiming_leaky_normal(ks[6], map_hidden_dim, map_output_dim),
        "bo": _linear_bias(ks[7], map_hidden_dim, map_output_dim),
    }


# ------------------------------- references ----------------------------------

def reference_forward_f32(z, p):
    """Pure-f32 reference (module semantics)."""
    def leaky(x):
        return jnp.where(x > 0, x, 0.2 * x)
    h = leaky(z @ p["w0"] + p["b0"])
    h = leaky(h @ p["w1"] + p["b1"])
    h = leaky(h @ p["w2"] + p["b2"])
    return h @ p["wo"] + p["bo"]


def reference_forward_bf16(z, p):
    """Reference using the same bf16-input / f32-accumulate matmul recipe as the kernel."""
    def leaky(x):
        return jnp.where(x > 0, x, 0.2 * x)

    def mm(a, w):
        return jnp.dot(a.astype(jnp.bfloat16), w.astype(jnp.bfloat16),
                       preferred_element_type=jnp.float32)

    h = leaky(mm(z, p["w0"]) + p["b0"])
    h = leaky(mm(h, p["w1"]) + p["b1"])
    h = leaky(mm(h, p["w2"]) + p["b2"])
    return mm(h, p["wo"]) + p["bo"]


# --------------------------------- main ---------------------------------------

if __name__ == "__main__":
    key = jax.random.PRNGKey(0)
    k_z, k_p, k_z2 = jax.random.split(key, 3)

    B, z_dim, H, O = 16, 32, 64, 16
    z = jax.random.normal(k_z, (B, z_dim), dtype=jnp.float32)
    params = make_params(k_p, z_dim, H, O)
    prepared = prepare_params(params)           # one-time pad + bf16 cast

    # --- small-batch (single grid step) path, jitted: graph == one pallas_call
    fwd = jax.jit(functools.partial(mapping_network_forward, max_batch_tile=512))
    out = jax.block_until_ready(fwd(z, prepared))
    assert out.shape == (B, O)

    ref_bf16 = reference_forward_bf16(z, params)
    assert jnp.allclose(out, ref_bf16, atol=2e-3, rtol=2e-3), \
        "mismatch vs bf16-matched reference"
    ref_f32 = reference_forward_f32(z, params)
    assert jnp.allclose(out, ref_f32, atol=5e-2, rtol=5e-2), \
        "mismatch vs f32 reference"

    # --- multi-step / boundary-block path (e.g. v7x dual-TC usage), B % bt != 0
    B2 = 300
    z2 = jax.random.normal(k_z2, (B2, z_dim), dtype=jnp.float32)
    out2 = jax.block_until_ready(
        mapping_network_forward(z2, prepared, max_batch_tile=128, min_grid_steps=2))
    assert out2.shape == (B2, O)
    ref2 = reference_forward_bf16(z2, params)
    assert jnp.allclose(out2, ref2, atol=2e-3, rtol=2e-3), \
        "mismatch vs bf16-matched reference (tiled path)"

    print("KERNEL_OK")
</pallas_src>

<mosaic_0001>
module attributes {stable_mosaic.version = 11 : i64} {
  func.func @_mapping_network_kernel(%arg0: i32, %arg1: memref<16x32xf32, #tpu.memory_space<vmem>>, %arg2: memref<32x128xbf16, #tpu.memory_space<vmem>>, %arg3: memref<1x128xf32, #tpu.memory_space<vmem>>, %arg4: memref<128x128xbf16, #tpu.memory_space<vmem>>, %arg5: memref<1x128xf32, #tpu.memory_space<vmem>>, %arg6: memref<128x128xbf16, #tpu.memory_space<vmem>>, %arg7: memref<1x128xf32, #tpu.memory_space<vmem>>, %arg8: memref<128x16xbf16, #tpu.memory_space<vmem>>, %arg9: memref<1x16xf32, #tpu.memory_space<vmem>>, %arg10: memref<16x16xf32, #tpu.memory_space<vmem>>) attributes {dimension_semantics = [#tpu.dimension_semantics<parallel>], iteration_bounds = array<i64: 1>, scalar_prefetch = 0 : i64, scratch_operands = 0 : i64, tpu.core_type = #tpu.core_type<tc>, window_params = [{transform_indices = @transform_0, window_bounds = array<i64: 16, 32>}, {pipeline_mode = #tpu.pipeline_mode<synchronous>, transform_indices = @transform_1, window_bounds = array<i64: 32, 128>}, {pipeline_mode = #tpu.pipeline_mode<synchronous>, transform_indices = @transform_2, window_bounds = array<i64: 1, 128>}, {pipeline_mode = #tpu.pipeline_mode<synchronous>, transform_indices = @transform_3, window_bounds = array<i64: 128, 128>}, {pipeline_mode = #tpu.pipeline_mode<synchronous>, transform_indices = @transform_4, window_bounds = array<i64: 1, 128>}, {pipeline_mode = #tpu.pipeline_mode<synchronous>, transform_indices = @transform_5, window_bounds = array<i64: 128, 128>}, {pipeline_mode = #tpu.pipeline_mode<synchronous>, transform_indices = @transform_6, window_bounds = array<i64: 1, 128>}, {pipeline_mode = #tpu.pipeline_mode<synchronous>, transform_indices = @transform_7, window_bounds = array<i64: 128, 16>}, {pipeline_mode = #tpu.pipeline_mode<synchronous>, transform_indices = @transform_8, window_bounds = array<i64: 1, 16>}, {transform_indices = @transform_9, window_bounds = array<i64: 16, 16>}]} {
    %c0 = arith.constant 0 : index
    %c0_0 = arith.constant 0 : index
    %0 = vector.load %arg1[%c0, %c0_0] : memref<16x32xf32, #tpu.memory_space<vmem>>, vector<16x32xf32>
    %1 = arith.truncf %0 : vector<16x32xf32> to vector<16x32xbf16>
    %c0_1 = arith.constant 0 : index
    %c0_2 = arith.constant 0 : index
    %2 = vector.load %arg2[%c0_1, %c0_2] : memref<32x128xbf16, #tpu.memory_space<vmem>>, vector<32x128xbf16>
    %cst = arith.constant dense<0.000000e+00> : vector<16x128xf32>
    %3 = tpu.matmul %1, %2, %cst {dimension_numbers = #tpu.dot_dimension_numbers<[1], [0], [0], [1], [0, 0, 1, 1], [], []>} : vector<16x32xbf16>, vector<32x128xbf16>, vector<16x128xf32> -> vector<16x128xf32>
    %c0_3 = arith.constant 0 : index
    %c0_4 = arith.constant 0 : index
    %4 = vector.load %arg3[%c0_3, %c0_4] : memref<1x128xf32, #tpu.memory_space<vmem>>, vector<1x128xf32>
    %5 = vector.broadcast %4 : vector<1x128xf32> to vector<16x128xf32>
    %6 = arith.addf %3, %5 : vector<16x128xf32>
    %cst_5 = arith.constant 0.000000e+00 : f32
    %7 = vector.broadcast %cst_5 : f32 to vector<16x128xf32>
    %8 = arith.cmpf ogt, %6, %7 : vector<16x128xf32>
    %cst_6 = arith.constant 2.000000e-01 : f32
    %9 = vector.broadcast %cst_6 : f32 to vector<16x128xf32>
    %10 = arith.mulf %9, %6 : vector<16x128xf32>
    %11 = arith.select %8, %6, %10 : vector<16x128xi1>, vector<16x128xf32>
    %12 = arith.truncf %11 : vector<16x128xf32> to vector<16x128xbf16>
    %c0_7 = arith.constant 0 : index
    %c0_8 = arith.constant 0 : index
    %13 = vector.load %arg4[%c0_7, %c0_8] : memref<128x128xbf16, #tpu.memory_space<vmem>>, vector<128x128xbf16>
    %cst_9 = arith.constant dense<0.000000e+00> : vector<16x128xf32>
    %14 = tpu.matmul %12, %13, %cst_9 {dimension_numbers = #tpu.dot_dimension_numbers<[1], [0], [0], [1], [0, 0, 1, 1], [], []>} : vector<16x128xbf16>, vector<128x128xbf16>, vector<16x128xf32> -> vector<16x128xf32>
    %c0_10 = arith.constant 0 : index
    %c0_11 = arith.constant 0 : index
    %15 = vector.load %arg5[%c0_10, %c0_11] : memref<1x128xf32, #tpu.memory_space<vmem>>, vector<1x128xf32>
    %16 = vector.broadcast %15 : vector<1x128xf32> to vector<16x128xf32>
    %17 = arith.addf %14, %16 : vector<16x128xf32>
    %cst_12 = arith.constant 0.000000e+00 : f32
    %18 = vector.broadcast %cst_12 : f32 to vector<16x128xf32>
    %19 = arith.cmpf ogt, %17, %18 : vector<16x128xf32>
    %cst_13 = arith.constant 2.000000e-01 : f32
    %20 = vector.broadcast %cst_13 : f32 to vector<16x128xf32>
    %21 = arith.mulf %20, %17 : vector<16x128xf32>
    %22 = arith.select %19, %17, %21 : vector<16x128xi1>, vector<16x128xf32>
    %23 = arith.truncf %22 : vector<16x128xf32> to vector<16x128xbf16>
    %c0_14 = arith.constant 0 : index
    %c0_15 = arith.constant 0 : index
    %24 = vector.load %arg6[%c0_14, %c0_15] : memref<128x128xbf16, #tpu.memory_space<vmem>>, vector<128x128xbf16>
    %cst_16 = arith.constant dense<0.000000e+00> : vector<16x128xf32>
    %25 = tpu.matmul %23, %24, %cst_16 {dimension_numbers = #tpu.dot_dimension_numbers<[1], [0], [0], [1], [0, 0, 1, 1], [], []>} : vector<16x128xbf16>, vector<128x128xbf16>, vector<16x128xf32> -> vector<16x128xf32>
    %c0_17 = arith.constant 0 : index
    %c0_18 = arith.constant 0 : index
    %26 = vector.load %arg7[%c0_17, %c0_18] : memref<1x128xf32, #tpu.memory_space<vmem>>, vector<1x128xf32>
    %27 = vector.broadcast %26 : vector<1x128xf32> to vector<16x128xf32>
    %28 = arith.addf %25, %27 : vector<16x128xf32>
    %cst_19 = arith.constant 0.000000e+00 : f32
    %29 = vector.broadcast %cst_19 : f32 to vector<16x128xf32>
    %30 = arith.cmpf ogt, %28, %29 : vector<16x128xf32>
    %cst_20 = arith.constant 2.000000e-01 : f32
    %31 = vector.broadcast %cst_20 : f32 to vector<16x128xf32>
    %32 = arith.mulf %31, %28 : vector<16x128xf32>
    %33 = arith.select %30, %28, %32 : vector<16x128xi1>, vector<16x128xf32>
    %34 = arith.truncf %33 : vector<16x128xf32> to vector<16x128xbf16>
    %c0_21 = arith.constant 0 : index
    %c0_22 = arith.constant 0 : index
    %35 = vector.load %arg8[%c0_21, %c0_22] : memref<128x16xbf16, #tpu.memory_space<vmem>>, vector<128x16xbf16>
    %cst_23 = arith.constant dense<0.000000e+00> : vector<16x16xf32>
    %36 = tpu.matmul %34, %35, %cst_23 {dimension_numbers = #tpu.dot_dimension_numbers<[1], [0], [0], [1], [0, 0, 1, 1], [], []>} : vector<16x128xbf16>, vector<128x16xbf16>, vector<16x16xf32> -> vector<16x16xf32>
    %c0_24 = arith.constant 0 : index
    %c0_25 = arith.constant 0 : index
    %37 = vector.load %arg9[%c0_24, %c0_25] : memref<1x16xf32, #tpu.memory_space<vmem>>, vector<1x16xf32>
    %38 = vector.broadcast %37 : vector<1x16xf32> to vector<16x16xf32>
    %39 = arith.addf %36, %38 : vector<16x16xf32>
    %c0_26 = arith.constant 0 : index
    %c0_27 = arith.constant 0 : index
    %40 = vector.load %arg10[%c0_26, %c0_27] : memref<16x16xf32, #tpu.memory_space<vmem>>, vector<16x16xf32>
    tpu.vector_store %arg10[%c0_26, %c0_27], %39 {strides = array<i32>} : memref<16x16xf32, #tpu.memory_space<vmem>>, vector<16x16xf32>,
    return
  }
  func.func @transform_0(%arg0: i32) -> (i32, i32) {
    %c0_i32 = arith.constant 0 : i32
    %c0_i32_0 = arith.constant 0 : i32
    return %arg0, %c0_i32 : i32, i32
  }
  func.func @transform_1(%arg0: i32) -> (i32, i32) {
    %c0_i32 = arith.constant 0 : i32
    %c0_i32_0 = arith.constant 0 : i32
    %c0_i32_1 = arith.constant 0 : i32
    return %c0_i32, %c0_i32_0 : i32, i32
  }
  func.func @transform_2(%arg0: i32) -> (i32, i32) {
    %c0_i32 = arith.constant 0 : i32
    %c0_i32_0 = arith.constant 0 : i32
    %c0_i32_1 = arith.constant 0 : i32
    return %c0_i32, %c0_i32_0 : i32, i32
  }
  func.func @transform_3(%arg0: i32) -> (i32, i32) {
    %c0_i32 = arith.constant 0 : i32
    %c0_i32_0 = arith.constant 0 : i32
    %c0_i32_1 = arith.constant 0 : i32
    return %c0_i32, %c0_i32_0 : i32, i32
  }
  func.func @transform_4(%arg0: i32) -> (i32, i32) {
    %c0_i32 = arith.constant 0 : i32
    %c0_i32_0 = arith.constant 0 : i32
    %c0_i32_1 = arith.constant 0 : i32
    return %c0_i32, %c0_i32_0 : i32, i32
  }
  func.func @transform_5(%arg0: i32) -> (i32, i32) {
    %c0_i32 = arith.constant 0 : i32
    %c0_i32_0 = arith.constant 0 : i32
    %c0_i32_1 = arith.constant 0 : i32
    return %c0_i32, %c0_i32_0 : i32, i32
  }
  func.func @transform_6(%arg0: i32) -> (i32, i32) {
    %c0_i32 = arith.constant 0 : i32
    %c0_i32_0 = arith.constant 0 : i32
    %c0_i32_1 = arith.constant 0 : i32
    return %c0_i32, %c0_i32_0 : i32, i32
  }
  func.func @transform_7(%arg0: i32) -> (i32, i32) {
    %c0_i32 = arith.constant 0 : i32
    %c0_i32_0 = arith.constant 0 : i32
    %c0_i32_1 = arith.constant 0 : i32
    return %c0_i32, %c0_i32_0 : i32, i32
  }
  func.func @transform_8(%arg0: i32) -> (i32, i32) {
    %c0_i32 = arith.constant 0 : i32
    %c0_i32_0 = arith.constant 0 : i32
    %c0_i32_1 = arith.constant 0 : i32
    return %c0_i32, %c0_i32_0 : i32, i32
  }
  func.func @transform_9(%arg0: i32) -> (i32, i32) {
    %c0_i32 = arith.constant 0 : i32
    %c0_i32_0 = arith.constant 0 : i32
    return %arg0, %c0_i32 : i32, i32
  }
}

</mosaic_0001>

<llo_original>
// kernel: mapping_network_forward.1
$region0: #{mapping_network_forward.1}
  #allocation0 [shape = 'u32[]', space=smem, size = 0x4, offset = 0x4, fixed_abs, tag = 'smem constant byte address 0x4 - core index']
  #allocation1 [shape = 'u32[72,128]{1,0:T(1,128)}', space=vmem, size = 0x9000, scoped, tag = 'internal scratch']
  %s0 = inlined_call_operand.hbm [shape: f32[16,32], index: 0, kind: input, shape index: {}]
  %s1 = inlined_call_operand.hbm [shape: bf16[32,128], index: 1, kind: input, shape index: {}]
  %s2 = inlined_call_operand.vmem [shape: f32[1,128], index: 2, kind: input, shape index: {}]
  %s3 = inlined_call_operand.vmem [shape: bf16[128,128], index: 3, kind: input, shape index: {}]
  %s4 = inlined_call_operand.vmem [shape: f32[1,128], index: 4, kind: input, shape index: {}]
  %s5 = inlined_call_operand.hbm [shape: bf16[128,128], index: 5, kind: input, shape index: {}]
  %s6 = inlined_call_operand.vmem [shape: f32[1,128], index: 6, kind: input, shape index: {}]
  %s7 = inlined_call_operand.vmem [shape: bf16[128,16], index: 7, kind: input, shape index: {}]
  %s8 = inlined_call_operand.vmem [shape: f32[1,16], index: 8, kind: input, shape index: {}]
  %s9 = inlined_call_operand.hbm [shape: f32[16,16], index: 9, kind: output, shape index: {}]
  %s10 = sld [smem:[#allocation0]]
  $region58: #{mapping_network_forward.1} parent=0
    _
  %s12 = ssub.s32 1, %s10
  %s13 = scalar_select 0, %s12, %s10
  $region1: #{mapping_network_forward.1} parent=0
    #allocation2 [shape = 'u8[8192]{0}', space=vmem, size = 0x2000, scoped, tag = 'input window, operand 0, single buffered']
    #allocation3 [shape = 's32[1]{0}', space=sflag, size = 0x4, scoped, tag = 'scoped memory for mapping_network_forward.1']
    #allocation4 [shape = 's32[1]{0}', space=sflag, size = 0x4, scoped, tag = 'scoped memory for mapping_network_forward.1']
    #allocation5 [shape = 'u8[8192]{0}', space=vmem, size = 0x2000, scoped, tag = 'input window, operand 1, single buffered']
    #allocation6 [shape = 's32[1]{0}', space=sflag, size = 0x4, scoped, tag = 'scoped memory for mapping_network_forward.1']
    #allocation7 [shape = 'u8[32768]{0}', space=vmem, size = 0x8000, scoped, tag = 'input window, operand 5, single buffered']
    #allocation8 [shape = 'u8[8192]{0}', space=vmem, size = 0x2000, scoped, tag = 'output window, operand 0, single buffered']
    %14 = vsyncpa [#allocation3], 0
    %15 = vsyncpa [#allocation6], 0
    %16 = vsyncpa [#allocation4], 0
    // Predicated region
    $region2: #{mapping_network_forward.1} parent=1 // pred_check
      _
    $region3: #{mapping_network_forward.1} parent=1 // pred_check_branch
      %18 = sbr.rel (0) target = $region5
    $region4: #{mapping_network_forward.1} parent=1 // pred_region
      %20 = vsyncadd [#allocation3], 0
      %s21 = sshll.u32 %s0, 4
      %s22 = int_to_ptr.hbm [resolvable:$true] %s21
      %s23 = sshll.u32 [#allocation2], 4
      %s24 = int_to_ptr.vmem [resolvable:$true] %s23
      %29 = dma.hbm_to_vmem [thread:$0]  %s22, 256, %s24, [#allocation3], 128, 128, 8
    $region5: #{mapping_network_forward.1} parent=1 // pred_fallthru
      _
    // Predicated region
    $region6: #{mapping_network_forward.1} parent=1 // pred_check
      _
    $region7: #{mapping_network_forward.1} parent=1 // pred_check_branch
      %31 = sbr.rel (0) target = $region9
    $region8: #{mapping_network_forward.1} parent=1 // pred_region
      %33 = vsyncadd [#allocation6], 0
      %s34 = sshll.u32 %s1, 4
      %s35 = int_to_ptr.hbm [resolvable:$true] %s34
      %s36 = sshll.u32 [#allocation5], 4
      %s37 = int_to_ptr.vmem [resolvable:$true] %s36
      %42 = dma.hbm_to_vmem [thread:$0]  %s35, 256, %s37, [#allocation6], 64, 64, 4
    $region9: #{mapping_network_forward.1} parent=1 // pred_fallthru
      _
    // Predicated region
    $region10: #{mapping_network_forward.1} parent=1 // pred_check
      _
    $region11: #{mapping_network_forward.1} parent=1 // pred_check_branch
      %44 = sbr.rel (0) target = $region13
    $region12: #{mapping_network_forward.1} parent=1 // pred_region
      _
    $region13: #{mapping_network_forward.1} parent=1 // pred_fallthru
      _
    // Predicated region
    $region14: #{mapping_network_forward.1} parent=1 // pred_check
      _
    $region15: #{mapping_network_forward.1} parent=1 // pred_check_branch
      %46 = sbr.rel (0) target = $region17
    $region16: #{mapping_network_forward.1} parent=1 // pred_region
      _
    $region17: #{mapping_network_forward.1} parent=1 // pred_fallthru
      _
    // Predicated region
    $region18: #{mapping_network_forward.1} parent=1 // pred_check
      _
    $region19: #{mapping_network_forward.1} parent=1 // pred_check_branch
      %48 = sbr.rel (0) target = $region21
    $region20: #{mapping_network_forward.1} parent=1 // pred_region
      _
    $region21: #{mapping_network_forward.1} parent=1 // pred_fallthru
      _
    // Predicated region
    $region22: #{mapping_network_forward.1} parent=1 // pred_check
      _
    $region23: #{mapping_network_forward.1} parent=1 // pred_check_branch
      %50 = sbr.rel (0) target = $region25
    $region24: #{mapping_network_forward.1} parent=1 // pred_region
      %52 = vsyncadd [#allocation6], 0
      %s53 = sshll.u32 %s5, 4
      %s54 = int_to_ptr.hbm [resolvable:$true] %s53
      %s55 = sshll.u32 [#allocation7], 4
      %s56 = int_to_ptr.vmem [resolvable:$true] %s55
      %61 = dma.hbm_to_vmem [thread:$0]  %s54, 1024, %s56, [#allocation6], 64, 64, 4
    $region25: #{mapping_network_forward.1} parent=1 // pred_fallthru
      _
    // Predicated region
    $region26: #{mapping_network_forward.1} parent=1 // pred_check
      _
    $region27: #{mapping_network_forward.1} parent=1 // pred_check_branch
      %63 = sbr.rel (0) target = $region29
    $region28: #{mapping_network_forward.1} parent=1 // pred_region
      _
    $region29: #{mapping_network_forward.1} parent=1 // pred_fallthru
      _
    // Predicated region
    $region30: #{mapping_network_forward.1} parent=1 // pred_check
      _
    $region31: #{mapping_network_forward.1} parent=1 // pred_check_branch
      %65 = sbr.rel (0) target = $region33
    $region32: #{mapping_network_forward.1} parent=1 // pred_region
      _
    $region33: #{mapping_network_forward.1} parent=1 // pred_fallthru
      _
    // Predicated region
    $region34: #{mapping_network_forward.1} parent=1 // pred_check
      _
    $region35: #{mapping_network_forward.1} parent=1 // pred_check_branch
      %67 = sbr.rel (0) target = $region37
    $region36: #{mapping_network_forward.1} parent=1 // pred_region
      _
    $region37: #{mapping_network_forward.1} parent=1 // pred_fallthru
      _
    // Predicated region
    $region38: #{mapping_network_forward.1} parent=1 // pred_check
      _
    $region39: #{mapping_network_forward.1} parent=1 // pred_check_branch
      %69 = sbr.rel (0) target = $region41
    $region40: #{mapping_network_forward.1} parent=1 // pred_region
      %71 = dma.done [#allocation3], 256
    $region41: #{mapping_network_forward.1} parent=1 // pred_fallthru
      _
    // Predicated region
    $region42: #{mapping_network_forward.1} parent=1 // pred_check
      _
    $region43: #{mapping_network_forward.1} parent=1 // pred_check_branch
      %73 = sbr.rel (0) target = $region45
    $region44: #{mapping_network_forward.1} parent=1 // pred_region
      %75 = dma.done [#allocation6], 256
    $region45: #{mapping_network_forward.1} parent=1 // pred_fallthru
      _
    // Predicated region
    $region46: #{mapping_network_forward.1} parent=1 // pred_check
      _
    $region47: #{mapping_network_forward.1} parent=1 // pred_check_branch
      %77 = sbr.rel (0) target = $region49
    $region48: #{mapping_network_forward.1} parent=1 // pred_region
      %79 = dma.done [#allocation6], 1024
    $region49: #{mapping_network_forward.1} parent=1 // pred_fallthru
      _
    %v81 = vld [vmem:[#allocation2] sm:$0xff]
    %v82 = vld [vmem:[#allocation2 + $0x8] sm:$0xff]
    %v83 = vpack.c.bf16 %v82, %v81
    %v84 = vld [vmem:[#allocation5] sm:$0xf]
    %v85 = vld [vmem:[#allocation5 + $0x4] sm:$0xf]
    %v86 = vld [vmem:[#allocation5 + $0x8] sm:$0xf]
    %v87 = vld [vmem:[#allocation5 + $0xc] sm:$0xf]
    %v88 = vld [vmem:[%s2] sm:$0x1]
    %v90 = vperm.slane %v88, 0
    %v96 = vunpack.c.l.b16 %v84
    %v97 = vunpack.c.l.b16 %v85
    %v98 = vunpack.c.l.b16 %v86
    %v99 = vunpack.c.l.b16 %v87
    %v100 = vpack.c.b16 %v97, %v96
    %v101 = vpack.c.b16 %v99, %v98
    %vm104 = vcmask 261120
    %v106 = vsel %vm104, %v83, 0
    %108 = vmatpush.bf16.msra.mxu0 0
    %109 = vmatpush.bf16.msra.mxu0 0
    %110 = vmatpush.bf16.msra.mxu0 0
    %111 = vmatpush.bf16.msra.mxu0 0
    %112 = vmatpush.bf16.msra.mxu0 0
    %113 = vmatpush.bf16.msra.mxu0 0
    %114 = vmatpush.bf16.msra.mxu0 %v101
    %115 = vmatpush.bf16.msra.mxu0 %v100
    %116 = vmatmul.bf16.gmra.mxu0 %v106
    %v117 = vpop.f32.mrf.mxu0
    %v118 = vadd.f32 %v90, %v117
    %v119 = vpop.f32.mrf.mxu0
    %v120 = vadd.f32 %v90, %v119
    %121 = vdwg.mxu0
    %vm122 = vcmp.gt.f32.partialorder %v118, 0.0
    %vm123 = vcmp.gt.f32.partialorder %v120, 0.0
    %v124 = vmul.f32 %v118, 0.2
    %v125 = vmul.f32 %v120, 0.2
    %v126 = vsel %vm122, %v118, %v124
    %v127 = vsel %vm123, %v120, %v125
    %v128 = vpack.c.bf16 %v127, %v126
    %v129 = vld [vmem:[%s3] sm:$0xf]
    %v130 = vld [vmem:[%s3 + $0x4] sm:$0xf]
    %v131 = vld [vmem:[%s3 + $0x8] sm:$0xf]
    %v132 = vld [vmem:[%s3 + $0xc] sm:$0xf]
    %v133 = vld [vmem:[%s3 + $0x10] sm:$0xf]
    %v134 = vld [vmem:[%s3 + $0x14] sm:$0xf]
    %v135 = vld [vmem:[%s3 + $0x18] sm:$0xf]
    %v136 = vld [vmem:[%s3 + $0x1c] sm:$0xf]
    %v137 = vld [vmem:[%s3 + $0x20] sm:$0xf]
    %v138 = vld [vmem:[%s3 + $0x24] sm:$0xf]
    %v139 = vld [vmem:[%s3 + $0x28] sm:$0xf]
    %v140 = vld [vmem:[%s3 + $0x2c] sm:$0xf]
    %v141 = vld [vmem:[%s3 + $0x30] sm:$0xf]
    %v142 = vld [vmem:[%s3 + $0x34] sm:$0xf]
    %v143 = vld [vmem:[%s3 + $0x38] sm:$0xf]
    %v144 = vld [vmem:[%s3 + $0x3c] sm:$0xf]
    %v145 = vld [vmem:[%s4] sm:$0x1]
    %v147 = vperm.slane %v145, 0
    %v165 = vunpack.c.l.b16 %v129
    %v166 = vunpack.c.l.b16 %v130
    %v167 = vunpack.c.l.b16 %v131
    %v168 = vunpack.c.l.b16 %v132
    %v169 = vunpack.c.l.b16 %v133
    %v170 = vunpack.c.l.b16 %v134
    %v171 = vunpack.c.l.b16 %v135
    %v172 = vunpack.c.l.b16 %v136
    %v173 = vunpack.c.l.b16 %v137
    %v174 = vunpack.c.l.b16 %v138
    %v175 = vunpack.c.l.b16 %v139
    %v176 = vunpack.c.l.b16 %v140
    %v177 = vunpack.c.l.b16 %v141
    %v178 = vunpack.c.l.b16 %v142
    %v179 = vunpack.c.l.b16 %v143
    %v180 = vunpack.c.l.b16 %v144
    %v181 = vpack.c.b16 %v166, %v165
    %v182 = vpack.c.b16 %v168, %v167
    %v183 = vpack.c.b16 %v170, %v169
    %v184 = vpack.c.b16 %v172, %v171
    %v185 = vpack.c.b16 %v174, %v173
    %v186 = vpack.c.b16 %v176, %v175
    %v187 = vpack.c.b16 %v178, %v177
    %v188 = vpack.c.b16 %v180, %v179
    %197 = vmatpush.bf16.msra.mxu0 %v188
    %198 = vmatpush.bf16.msra.mxu0 %v187
    %199 = vmatpush.bf16.msra.mxu0 %v186
    %200 = vmatpush.bf16.msra.mxu0 %v185
    %201 = vmatpush.bf16.msra.mxu0 %v184
    %202 = vmatpush.bf16.msra.mxu0 %v183
    %203 = vmatpush.bf16.msra.mxu0 %v182
    %204 = vmatpush.bf16.msra.mxu0 %v181
    %205 = vmatmul.bf16.gmra.mxu0 %v128
    %v206 = vpop.f32.mrf.mxu0
    %v207 = vadd.f32 %v147, %v206
    %v208 = vpop.f32.mrf.mxu0
    %v209 = vadd.f32 %v147, %v208
    %210 = vdwg.mxu0
    %vm211 = vcmp.gt.f32.partialorder %v207, 0.0
    %vm212 = vcmp.gt.f32.partialorder %v209, 0.0
    %v213 = vmul.f32 %v207, 0.2
    %v214 = vmul.f32 %v209, 0.2
    %v215 = vsel %vm211, %v207, %v213
    %v216 = vsel %vm212, %v209, %v214
    %v217 = vpack.c.bf16 %v216, %v215
    %v218 = vld [vmem:[#allocation7] sm:$0xf]
    %v219 = vld [vmem:[#allocation7 + $0x4] sm:$0xf]
    %v220 = vld [vmem:[#allocation7 + $0x8] sm:$0xf]
    %v221 = vld [vmem:[#allocation7 + $0xc] sm:$0xf]
    %v222 = vld [vmem:[#allocation7 + $0x10] sm:$0xf]
    %v223 = vld [vmem:[#allocation7 + $0x14] sm:$0xf]
    %v224 = vld [vmem:[#allocation7 + $0x18] sm:$0xf]
    %v225 = vld [vmem:[#allocation7 + $0x1c] sm:$0xf]
    %v226 = vld [vmem:[#allocation7 + $0x20] sm:$0xf]
    %v227 = vld [vmem:[#allocation7 + $0x24] sm:$0xf]
    %v228 = vld [vmem:[#allocation7 + $0x28] sm:$0xf]
    %v229 = vld [vmem:[#allocation7 + $0x2c] sm:$0xf]
    %v230 = vld [vmem:[#allocation7 + $0x30] sm:$0xf]
    %v231 = vld [vmem:[#allocation7 + $0x34] sm:$0xf]
    %v232 = vld [vmem:[#allocation7 + $0x38] sm:$0xf]
    %v233 = vld [vmem:[#allocation7 + $0x3c] sm:$0xf]
    %v234 = vld [vmem:[%s6] sm:$0x1]
    %v236 = vperm.slane %v234, 0
    %v254 = vunpack.c.l.b16 %v218
    %v255 = vunpack.c.l.b16 %v219
    %v256 = vunpack.c.l.b16 %v220
    %v257 = vunpack.c.l.b16 %v221
    %v258 = vunpack.c.l.b16 %v222
    %v259 = vunpack.c.l.b16 %v223
    %v260 = vunpack.c.l.b16 %v224
    %v261 = vunpack.c.l.b16 %v225
    %v262 = vunpack.c.l.b16 %v226
    %v263 = vunpack.c.l.b16 %v227
    %v264 = vunpack.c.l.b16 %v228
    %v265 = vunpack.c.l.b16 %v229
    %v266 = vunpack.c.l.b16 %v230
    %v267 = vunpack.c.l.b16 %v231
    %v268 = vunpack.c.l.b16 %v232
    %v269 = vunpack.c.l.b16 %v233
    %v270 = vpack.c.b16 %v255, %v254
    %v271 = vpack.c.b16 %v257, %v256
    %v272 = vpack.c.b16 %v259, %v258
    %v273 = vpack.c.b16 %v261, %v260
    %v274 = vpack.c.b16 %v263, %v262
    %v275 = vpack.c.b16 %v265, %v264
    %v276 = vpack.c.b16 %v267, %v266
    %v277 = vpack.c.b16 %v269, %v268
    %286 = vmatpush.bf16.msra.mxu0 %v277
    %287 = vmatpush.bf16.msra.mxu0 %v276
    %288 = vmatpush.bf16.msra.mxu0 %v275
    %289 = vmatpush.bf16.msra.mxu0 %v274
    %290 = vmatpush.bf16.msra.mxu0 %v273
    %291 = vmatpush.bf16.msra.mxu0 %v272
    %292 = vmatpush.bf16.msra.mxu0 %v271
    %293 = vmatpush.bf16.msra.mxu0 %v270
    %294 = vmatmul.bf16.gmra.mxu0 %v217
    %v295 = vpop.f32.mrf.mxu0
    %v296 = vadd.f32 %v236, %v295
    %v297 = vpop.f32.mrf.mxu0
    %v298 = vadd.f32 %v236, %v297
    %299 = vdwg.mxu0
    %vm300 = vcmp.gt.f32.partialorder %v296, 0.0
    %vm301 = vcmp.gt.f32.partialorder %v298, 0.0
    %v302 = vmul.f32 %v296, 0.2
    %v303 = vmul.f32 %v298, 0.2
    %v304 = vsel %vm300, %v296, %v302
    %v305 = vsel %vm301, %v298, %v303
    %v306 = vpack.c.bf16 %v305, %v304
    %v307 = vld [vmem:[%s7] sm:$0xf]
    %v308 = vld [vmem:[%s7 + $0x4] sm:$0xf]
    %v309 = vld [vmem:[%s7 + $0x8] sm:$0xf]
    %v310 = vld [vmem:[%s7 + $0xc] sm:$0xf]
    %v311 = vld [vmem:[%s7 + $0x10] sm:$0xf]
    %v312 = vld [vmem:[%s7 + $0x14] sm:$0xf]
    %v313 = vld [vmem:[%s7 + $0x18] sm:$0xf]
    %v314 = vld [vmem:[%s7 + $0x1c] sm:$0xf]
    %v315 = vld [vmem:[%s7 + $0x20] sm:$0xf]
    %v316 = vld [vmem:[%s7 + $0x24] sm:$0xf]
    %v317 = vld [vmem:[%s7 + $0x28] sm:$0xf]
    %v318 = vld [vmem:[%s7 + $0x2c] sm:$0xf]
    %v319 = vld [vmem:[%s7 + $0x30] sm:$0xf]
    %v320 = vld [vmem:[%s7 + $0x34] sm:$0xf]
    %v321 = vld [vmem:[%s7 + $0x38] sm:$0xf]
    %v322 = vld [vmem:[%s7 + $0x3c] sm:$0xf]
    %v323 = vld [vmem:[%s8] sm:$0x1]
    %v325 = vperm.slane %v323, 0
    %v343 = vunpack.c.l.b16 %v307
    %v344 = vunpack.c.l.b16 %v308
    %v345 = vunpack.c.l.b16 %v309
    %v346 = vunpack.c.l.b16 %v310
    %v347 = vunpack.c.l.b16 %v311
    %v348 = vunpack.c.l.b16 %v312
    %v349 = vunpack.c.l.b16 %v313
    %v350 = vunpack.c.l.b16 %v314
    %v351 = vunpack.c.l.b16 %v315
    %v352 = vunpack.c.l.b16 %v316
    %v353 = vunpack.c.l.b16 %v317
    %v354 = vunpack.c.l.b16 %v318
    %v355 = vunpack.c.l.b16 %v319
    %v356 = vunpack.c.l.b16 %v320
    %v357 = vunpack.c.l.b16 %v321
    %v358 = vunpack.c.l.b16 %v322
    %v359 = vpack.c.b16 %v344, %v343
    %v360 = vpack.c.b16 %v346, %v345
    %v361 = vpack.c.b16 %v348, %v347
    %v362 = vpack.c.b16 %v350, %v349
    %v363 = vpack.c.b16 %v352, %v351
    %v364 = vpack.c.b16 %v354, %v353
    %v365 = vpack.c.b16 %v356, %v355
    %v366 = vpack.c.b16 %v358, %v357
    %375 = vmatpush.bf16.msra.mxu0 %v366
    %376 = vmatpush.bf16.msra.mxu0 %v365
    %377 = vmatpush.bf16.msra.mxu0 %v364
    %378 = vmatpush.bf16.msra.mxu0 %v363
    %379 = vmatpush.bf16.msra.mxu0 %v362
    %380 = vmatpush.bf16.msra.mxu0 %v361
    %381 = vmatpush.bf16.msra.mxu0 %v360
    %382 = vmatpush.bf16.msra.mxu0 %v359
    %383 = vmatmul.bf16.gmra.mxu0 %v306
    %v384 = vpop.f32.mrf.mxu0
    %v385 = vadd.f32 %v325, %v384
    %v386 = vpop.f32.mrf.mxu0
    %v387 = vadd.f32 %v325, %v386
    %388 = vdwg.mxu0
    %vm389 = vcmask 130048
    %390 = vst.msk [vmem:[#allocation8] sm:$0xff] %vm389, %v385
    %391 = vst.msk [vmem:[#allocation8 + $0x8] sm:$0xff] %vm389, %v387
    // Predicated region
    $region50: #{mapping_network_forward.1} parent=1 // pred_check
      _
    $region51: #{mapping_network_forward.1} parent=1 // pred_check_branch
      %393 = sbr.rel (0) target = $region53
    $region52: #{mapping_network_forward.1} parent=1 // pred_region
      %395 = vsyncadd [#allocation4], 0
      %s396 = sshll.u32 [#allocation8], 4
      %s397 = int_to_ptr.vmem [resolvable:$true] %s396
      %s398 = sshll.u32 %s9, 4
      %s399 = int_to_ptr.hbm [resolvable:$true] %s398
      %404 = dma.vmem_to_hbm [thread:$0]  %s397, 256, %s399, [#allocation4], 128, 128, 8
    $region53: #{mapping_network_forward.1} parent=1 // pred_fallthru
      _
    // Predicated region
    $region54: #{mapping_network_forward.1} parent=1 // pred_check
      _
    $region55: #{mapping_network_forward.1} parent=1 // pred_check_branch
      %406 = sbr.rel (0) target = $region57
    $region56: #{mapping_network_forward.1} parent=1 // pred_region
      %408 = dma.done [#allocation4], 256
    $region57: #{mapping_network_forward.1} parent=1 // pred_fallthru
      _
    %409 = vsyncpa [#allocation3], 1
    %410 = vsyncpa [#allocation6], 1
    %411 = vsyncpa [#allocation4], 1

</llo_original>
